<compile_context>
chip_gen: v5e
topology: v5e:2x2
jax: 0.10.0
libtpu: 0.0.40
codegen_flags: <defaults>
</compile_context>

<pallas_src>
import numpy as np

import jax
import jax.numpy as jnp
from jax.experimental import pallas as pl
from jax.experimental.pallas import tpu as pltpu


# ------------------------------ fused kernel ------------------------------- #

def _fused_kernel(x_ref, w1_ref, ws_ref, b_ref, o_ref):
    """x:[TB,48] bf16; w1:[48,128] bf16; ws:[4,128,128] bf16 (conv2,fc1,fc2,fc3);
    b:[8,128] f32 bias slab (row i = layer i); o:[TB,8] f32.

    All padded lanes/rows of the weights and biases are zero, so padded
    activation lanes stay exactly zero through every ReLU and never
    contaminate real features.
    """
    b = b_ref[...]
    h = x_ref[...]                                                   # bf16 [TB, 48]
    # conv1 (as matmul) + ReLU
    h = jnp.maximum(
        jnp.dot(h, w1_ref[...], preferred_element_type=jnp.float32) + b[0:1, :],
        0.0).astype(jnp.bfloat16)
    # conv2 (as matmul, columns already in NCHW flatten order) + ReLU
    h = jnp.maximum(
        jnp.dot(h, ws_ref[0], preferred_element_type=jnp.float32) + b[1:2, :],
        0.0).astype(jnp.bfloat16)
    # fc1 + ReLU
    h = jnp.maximum(
        jnp.dot(h, ws_ref[1], preferred_element_type=jnp.float32) + b[2:3, :],
        0.0).astype(jnp.bfloat16)
    # fc2 + ReLU
    h = jnp.maximum(
        jnp.dot(h, ws_ref[2], preferred_element_type=jnp.float32) + b[3:4, :],
        0.0).astype(jnp.bfloat16)
    # fc3: logits live in lanes 0..6; only the first 8 lanes are written back.
    logits = jnp.dot(h, ws_ref[3], preferred_element_type=jnp.float32) + b[4:5, :]
    o_ref[...] = logits[:, :8]


# --------------------------- wrapper-side plumbing -------------------------- #

def _round_up(n, m):
    return (n + m - 1) // m * m


def _conv_as_matrix(w_im2col, cin, h, w, kh, kw):
    """Fold a valid 3x3 conv into a dense matrix.

    w_im2col: [cin*kh*kw, cout], feature order (cin, kh, kw)  (== flattened
    PyTorch Conv2d weight, transposed).
    Returns M: [cin*h*w, cout*ho*wo] with output columns in (cout, oh, ow)
    order (PyTorch's NCHW flatten order), so conv(x) == x_flat @ M.
    """
    cout = w_im2col.shape[1]
    ho, wo = h - kh + 1, w - kw + 1
    sel = np.zeros((cin * h * w, ho * wo, cin * kh * kw), np.float32)  # constant 0/1
    for ci in range(cin):
        for i in range(kh):
            for j in range(kw):
                k = ci * kh * kw + i * kw + j
                for oh in range(ho):
                    for ow in range(wo):
                        f_in = ci * h * w + (oh + i) * w + (ow + j)
                        sel[f_in, oh * wo + ow, k] = 1.0
    m = jnp.einsum("fpk,kc->fcp", jnp.asarray(sel), w_im2col)  # [f_in, cout, ho*wo]
    return m.reshape(cin * h * w, cout * ho * wo)


def _pad2(a, rows, cols, dtype=jnp.bfloat16):
    r, c = a.shape
    return jnp.pad(a.astype(jnp.float32), ((0, rows - r), (0, cols - c))).astype(dtype)


def _pad_row(v, cols=128):
    return jnp.pad(v.astype(jnp.float32), (0, cols - v.shape[0]))


def prepare_params(params):
    """Fold convs to matrices, pad, cast to bf16, build bias slab.

    Run ONCE (outside the per-call forward) and cache the result.
    """
    m1 = _conv_as_matrix(params["w_conv1"], cin=1, h=6, w=7, kh=3, kw=3)   # [42, 120]
    m2 = _conv_as_matrix(params["w_conv2"], cin=6, h=4, w=5, kh=3, kw=3)   # [120, 96]
    w1 = _pad2(m1, 48, 128)                          # conv1, sublane-padded only
    w_stack = jnp.stack([
        _pad2(m2, 128, 128),                         # conv2
        _pad2(params["w_fc1"], 128, 128),            # 96 -> 128
        _pad2(params["w_fc2"], 128, 128),            # 128 -> 64
        _pad2(params["w_fc3"], 128, 128),            # 64 -> 7
    ], axis=0)                                       # [4, 128, 128] bf16
    bias = jnp.stack([
        _pad_row(jnp.repeat(params["b_conv1"], 4 * 5)),   # per (co, oh, ow) of conv1
        _pad_row(jnp.repeat(params["b_conv2"], 2 * 3)),   # per (co, oh, ow) of conv2
        _pad_row(params["b_fc1"]),
        _pad_row(params["b_fc2"]),
        _pad_row(params["b_fc3"]),
        jnp.zeros((128,), jnp.float32),
        jnp.zeros((128,), jnp.float32),
        jnp.zeros((128,), jnp.float32),
    ], axis=0)                                       # [8, 128] f32 bias slab
    return {"w1": w1, "w_stack": w_stack, "bias": bias}


def neuralnet_forward(x, prepared, *, block_b=1024):
    """Pallas implementation of NeuralNet.forward. x: [B, 1, 6, 7] float32."""
    B = x.shape[0]
    assert x.shape[1:] == (1, 6, 7), "fc1 (16*2*3) implies a 1x6x7 input"

    # Lane-slim, batch-tiled bf16 input: [B, 42] -> [bp, 48]; bp only rounds B
    # up to the bf16 sublane tile (16), not to the batch tile.
    x_flat = x.reshape(B, 1 * 6 * 7).astype(jnp.bfloat16)
    bp = _round_up(B, 16)
    x_pad = jnp.pad(x_flat, ((0, bp - B), (0, 48 - x_flat.shape[1])))

    # Batch tile: multiple of 16, as large as block_b, but capped so the grid
    # has >=2 steps whenever possible (keeps both v7x TensorCores busy).
    tb = max(16, min(block_b, _round_up(pl.cdiv(bp, 2), 16)))
    grid = (pl.cdiv(bp, tb),)   # rows are independent -> OOB tail block is harmless

    out = pl.pallas_call(
        _fused_kernel,
        out_shape=jax.ShapeDtypeStruct((bp, 8), jnp.float32),
        grid=grid,
        in_specs=[
            pl.BlockSpec((tb, 48), lambda i: (i, 0)),        # activations (streamed)
            pl.BlockSpec((48, 128), lambda i: (0, 0)),       # conv1 matrix (resident)
            pl.BlockSpec((4, 128, 128), lambda i: (0, 0, 0)),  # conv2/fc1/fc2/fc3 stack
            pl.BlockSpec((8, 128), lambda i: (0, 0)),        # bias slab (resident)
        ],
        out_specs=pl.BlockSpec((tb, 8), lambda i: (i, 0)),   # slim f32 writeback
        compiler_params=pltpu.CompilerParams(
            dimension_semantics=("parallel",),       # shard batch across TCs (v7x)
            vmem_limit_bytes=32 * 1024 * 1024),
    )(x_pad, prepared["w1"], prepared["w_stack"], prepared["bias"])

    # TODO(synk): on v5e, if masked 8-lane stores ever bind the single vst slot,
    # switch the output to a lane-dense bf16 [bp, 128] slab instead.
    return out[:B, :7]


# ------------------------- pure-JAX reference check ------------------------- #

def reference_forward(x, params):
    w1 = jnp.transpose(params["w_conv1"]).reshape(6, 1, 3, 3)   # OIHW
    y = jax.lax.conv_general_dilated(
        x, w1, (1, 1), "VALID", dimension_numbers=("NCHW", "OIHW", "NCHW"))
    y = jnp.maximum(y + params["b_conv1"][None, :, None, None], 0.0)
    w2 = jnp.transpose(params["w_conv2"]).reshape(16, 6, 3, 3)
    y = jax.lax.conv_general_dilated(
        y, w2, (1, 1), "VALID", dimension_numbers=("NCHW", "OIHW", "NCHW"))
    y = jnp.maximum(y + params["b_conv2"][None, :, None, None], 0.0)
    y = y.reshape(y.shape[0], -1)
    y = jnp.maximum(y @ params["w_fc1"] + params["b_fc1"], 0.0)
    y = jnp.maximum(y @ params["w_fc2"] + params["b_fc2"], 0.0)
    return y @ params["w_fc3"] + params["b_fc3"]


# ----------------------------------- main ----------------------------------- #

if __name__ == "__main__":
    key = jax.random.PRNGKey(0)
    ks = jax.random.split(key, 11)

    # Deterministic synthetic parameters (shapes from NeuralNet.__init__):
    #   conv weights im2col-style [Cin*KH*KW, Cout], FC weights [in, out].
    params = {
        "w_conv1": 0.1 * jax.random.normal(ks[0], (1 * 3 * 3, 6), jnp.float32),
        "b_conv1": 0.1 * jax.random.normal(ks[1], (6,), jnp.float32),
        "w_conv2": 0.1 * jax.random.normal(ks[2], (6 * 3 * 3, 16), jnp.float32),
        "b_conv2": 0.1 * jax.random.normal(ks[3], (16,), jnp.float32),
        "w_fc1":   0.1 * jax.random.normal(ks[4], (16 * 2 * 3, 128), jnp.float32),
        "b_fc1":   0.1 * jax.random.normal(ks[5], (128,), jnp.float32),
        "w_fc2":   0.1 * jax.random.normal(ks[6], (128, 64), jnp.float32),
        "b_fc2":   0.1 * jax.random.normal(ks[7], (64,), jnp.float32),
        "w_fc3":   0.1 * jax.random.normal(ks[8], (64, 7), jnp.float32),
        "b_fc3":   0.1 * jax.random.normal(ks[9], (7,), jnp.float32),
    }

    # Input spatial size 6x7 is forced by fc1's 16*2*3 input features
    # (two valid 3x3 convs: 6x7 -> 4x5 -> 2x3).
    x = jax.random.normal(ks[10], (2, 1, 6, 7), jnp.float32)

    # Weight preparation is hoisted out of the forward path (done once).
    prepared = jax.tree_util.tree_map(jax.block_until_ready, prepare_params(params))

    fwd = jax.jit(neuralnet_forward)
    out = jax.block_until_ready(fwd(x, prepared))
    assert out.shape == (2, 7) and out.dtype == jnp.float32

    ref = jax.block_until_ready(reference_forward(x, params))
    # bf16 matmul inputs (f32 accumulation) -> slightly looser tolerance.
    assert jnp.allclose(out, ref, rtol=2e-2, atol=2e-2), (out, ref)

    print("KERNEL_OK")
</pallas_src>

<mosaic_0001>
module attributes {stable_mosaic.version = 11 : i64} {
  func.func @_fused_kernel(%arg0: i32, %arg1: memref<16x48xbf16, #tpu.memory_space<vmem>>, %arg2: memref<48x128xbf16, #tpu.memory_space<vmem>>, %arg3: memref<4x128x128xbf16, #tpu.memory_space<vmem>>, %arg4: memref<8x128xf32, #tpu.memory_space<vmem>>, %arg5: memref<16x8xf32, #tpu.memory_space<vmem>>) attributes {dimension_semantics = [#tpu.dimension_semantics<parallel>], iteration_bounds = array<i64: 1>, scalar_prefetch = 0 : i64, scratch_operands = 0 : i64, tpu.core_type = #tpu.core_type<tc>, window_params = [{transform_indices = @transform_0, window_bounds = array<i64: 16, 48>}, {pipeline_mode = #tpu.pipeline_mode<synchronous>, transform_indices = @transform_1, window_bounds = array<i64: 48, 128>}, {pipeline_mode = #tpu.pipeline_mode<synchronous>, transform_indices = @transform_2, window_bounds = array<i64: 4, 128, 128>}, {pipeline_mode = #tpu.pipeline_mode<synchronous>, transform_indices = @transform_3, window_bounds = array<i64: 8, 128>}, {transform_indices = @transform_4, window_bounds = array<i64: 16, 8>}]} {
    %c0 = arith.constant 0 : index
    %c0_0 = arith.constant 0 : index
    %0 = vector.load %arg4[%c0, %c0_0] : memref<8x128xf32, #tpu.memory_space<vmem>>, vector<8x128xf32>
    %c0_1 = arith.constant 0 : index
    %c0_2 = arith.constant 0 : index
    %1 = vector.load %arg1[%c0_1, %c0_2] : memref<16x48xbf16, #tpu.memory_space<vmem>>, vector<16x48xbf16>
    %c0_3 = arith.constant 0 : index
    %c0_4 = arith.constant 0 : index
    %2 = vector.load %arg2[%c0_3, %c0_4] : memref<48x128xbf16, #tpu.memory_space<vmem>>, vector<48x128xbf16>
    %cst = arith.constant dense<0.000000e+00> : vector<16x128xf32>
    %3 = tpu.matmul %1, %2, %cst {dimension_numbers = #tpu.dot_dimension_numbers<[1], [0], [0], [1], [0, 0, 1, 1], [], []>} : vector<16x48xbf16>, vector<48x128xbf16>, vector<16x128xf32> -> vector<16x128xf32>
    %4 = vector.extract_strided_slice %0 {offsets = [0, 0], sizes = [1, 128], strides = [1, 1]} : vector<8x128xf32> to vector<1x128xf32>
    %5 = vector.broadcast %4 : vector<1x128xf32> to vector<16x128xf32>
    %6 = arith.addf %3, %5 : vector<16x128xf32>
    %cst_5 = arith.constant 0.000000e+00 : f32
    %7 = vector.broadcast %cst_5 : f32 to vector<16x128xf32>
    %8 = arith.maximumf %6, %7 : vector<16x128xf32>
    %9 = arith.truncf %8 : vector<16x128xf32> to vector<16x128xbf16>
    %c0_6 = arith.constant 0 : index
    %c0_7 = arith.constant 0 : index
    %c0_8 = arith.constant 0 : index
    %10 = vector.load %arg3[%c0_6, %c0_7, %c0_8] : memref<4x128x128xbf16, #tpu.memory_space<vmem>>, vector<1x128x128xbf16>
    %11 = vector.shape_cast %10 : vector<1x128x128xbf16> to vector<128x128xbf16>
    %cst_9 = arith.constant dense<0.000000e+00> : vector<16x128xf32>
    %12 = tpu.matmul %9, %11, %cst_9 {dimension_numbers = #tpu.dot_dimension_numbers<[1], [0], [0], [1], [0, 0, 1, 1], [], []>} : vector<16x128xbf16>, vector<128x128xbf16>, vector<16x128xf32> -> vector<16x128xf32>
    %13 = vector.extract_strided_slice %0 {offsets = [1, 0], sizes = [1, 128], strides = [1, 1]} : vector<8x128xf32> to vector<1x128xf32>
    %14 = vector.broadcast %13 : vector<1x128xf32> to vector<16x128xf32>
    %15 = arith.addf %12, %14 : vector<16x128xf32>
    %cst_10 = arith.constant 0.000000e+00 : f32
    %16 = vector.broadcast %cst_10 : f32 to vector<16x128xf32>
    %17 = arith.maximumf %15, %16 : vector<16x128xf32>
    %18 = arith.truncf %17 : vector<16x128xf32> to vector<16x128xbf16>
    %c1 = arith.constant 1 : index
    %c0_11 = arith.constant 0 : index
    %c0_12 = arith.constant 0 : index
    %19 = vector.load %arg3[%c1, %c0_11, %c0_12] : memref<4x128x128xbf16, #tpu.memory_space<vmem>>, vector<1x128x128xbf16>
    %20 = vector.shape_cast %19 : vector<1x128x128xbf16> to vector<128x128xbf16>
    %cst_13 = arith.constant dense<0.000000e+00> : vector<16x128xf32>
    %21 = tpu.matmul %18, %20, %cst_13 {dimension_numbers = #tpu.dot_dimension_numbers<[1], [0], [0], [1], [0, 0, 1, 1], [], []>} : vector<16x128xbf16>, vector<128x128xbf16>, vector<16x128xf32> -> vector<16x128xf32>
    %22 = vector.extract_strided_slice %0 {offsets = [2, 0], sizes = [1, 128], strides = [1, 1]} : vector<8x128xf32> to vector<1x128xf32>
    %23 = vector.broadcast %22 : vector<1x128xf32> to vector<16x128xf32>
    %24 = arith.addf %21, %23 : vector<16x128xf32>
    %cst_14 = arith.constant 0.000000e+00 : f32
    %25 = vector.broadcast %cst_14 : f32 to vector<16x128xf32>
    %26 = arith.maximumf %24, %25 : vector<16x128xf32>
    %27 = arith.truncf %26 : vector<16x128xf32> to vector<16x128xbf16>
    %c2 = arith.constant 2 : index
    %c0_15 = arith.constant 0 : index
    %c0_16 = arith.constant 0 : index
    %28 = vector.load %arg3[%c2, %c0_15, %c0_16] : memref<4x128x128xbf16, #tpu.memory_space<vmem>>, vector<1x128x128xbf16>
    %29 = vector.shape_cast %28 : vector<1x128x128xbf16> to vector<128x128xbf16>
    %cst_17 = arith.constant dense<0.000000e+00> : vector<16x128xf32>
    %30 = tpu.matmul %27, %29, %cst_17 {dimension_numbers = #tpu.dot_dimension_numbers<[1], [0], [0], [1], [0, 0, 1, 1], [], []>} : vector<16x128xbf16>, vector<128x128xbf16>, vector<16x128xf32> -> vector<16x128xf32>
    %31 = vector.extract_strided_slice %0 {offsets = [3, 0], sizes = [1, 128], strides = [1, 1]} : vector<8x128xf32> to vector<1x128xf32>
    %32 = vector.broadcast %31 : vector<1x128xf32> to vector<16x128xf32>
    %33 = arith.addf %30, %32 : vector<16x128xf32>
    %cst_18 = arith.constant 0.000000e+00 : f32
    %34 = vector.broadcast %cst_18 : f32 to vector<16x128xf32>
    %35 = arith.maximumf %33, %34 : vector<16x128xf32>
    %36 = arith.truncf %35 : vector<16x128xf32> to vector<16x128xbf16>
    %c3 = arith.constant 3 : index
    %c0_19 = arith.constant 0 : index
    %c0_20 = arith.constant 0 : index
    %37 = vector.load %arg3[%c3, %c0_19, %c0_20] : memref<4x128x128xbf16, #tpu.memory_space<vmem>>, vector<1x128x128xbf16>
    %38 = vector.shape_cast %37 : vector<1x128x128xbf16> to vector<128x128xbf16>
    %cst_21 = arith.constant dense<0.000000e+00> : vector<16x128xf32>
    %39 = tpu.matmul %36, %38, %cst_21 {dimension_numbers = #tpu.dot_dimension_numbers<[1], [0], [0], [1], [0, 0, 1, 1], [], []>} : vector<16x128xbf16>, vector<128x128xbf16>, vector<16x128xf32> -> vector<16x128xf32>
    %40 = vector.extract_strided_slice %0 {offsets = [4, 0], sizes = [1, 128], strides = [1, 1]} : vector<8x128xf32> to vector<1x128xf32>
    %41 = vector.broadcast %40 : vector<1x128xf32> to vector<16x128xf32>
    %42 = arith.addf %39, %41 : vector<16x128xf32>
    %43 = vector.extract_strided_slice %42 {offsets = [0, 0], sizes = [16, 8], strides = [1, 1]} : vector<16x128xf32> to vector<16x8xf32>
    %c0_22 = arith.constant 0 : index
    %c0_23 = arith.constant 0 : index
    %44 = vector.load %arg5[%c0_22, %c0_23] : memref<16x8xf32, #tpu.memory_space<vmem>>, vector<16x8xf32>
    tpu.vector_store %arg5[%c0_22, %c0_23], %43 {strides = array<i32>} : memref<16x8xf32, #tpu.memory_space<vmem>>, vector<16x8xf32>,
    return
  }
  func.func @transform_0(%arg0: i32) -> (i32, i32) {
    %c0_i32 = arith.constant 0 : i32
    %c0_i32_0 = arith.constant 0 : i32
    return %arg0, %c0_i32 : i32, i32
  }
  func.func @transform_1(%arg0: i32) -> (i32, i32) {
    %c0_i32 = arith.constant 0 : i32
    %c0_i32_0 = arith.constant 0 : i32
    %c0_i32_1 = arith.constant 0 : i32
    return %c0_i32, %c0_i32_0 : i32, i32
  }
  func.func @transform_2(%arg0: i32) -> (i32, i32, i32) {
    %c0_i32 = arith.constant 0 : i32
    %c0_i32_0 = arith.constant 0 : i32
    %c0_i32_1 = arith.constant 0 : i32
    %c0_i32_2 = arith.constant 0 : i32
    return %c0_i32, %c0_i32_0, %c0_i32_1 : i32, i32, i32
  }
  func.func @transform_3(%arg0: i32) -> (i32, i32) {
    %c0_i32 = arith.constant 0 : i32
    %c0_i32_0 = arith.constant 0 : i32
    %c0_i32_1 = arith.constant 0 : i32
    return %c0_i32, %c0_i32_0 : i32, i32
  }
  func.func @transform_4(%arg0: i32) -> (i32, i32) {
    %c0_i32 = arith.constant 0 : i32
    %c0_i32_0 = arith.constant 0 : i32
    return %arg0, %c0_i32 : i32, i32
  }
}

</mosaic_0001>

<llo_original>
// kernel: neuralnet_forward.1
$region0: #{neuralnet_forward.1}
  #allocation0 [shape = 'u32[]', space=smem, size = 0x4, offset = 0x4, fixed_abs, tag = 'smem constant byte address 0x4 - core index']
  #allocation1 [shape = 'u32[72,128]{1,0:T(1,128)}', space=vmem, size = 0x9000, scoped, tag = 'internal scratch']
  %s0 = inlined_call_operand.vmem [shape: bf16[16,48], index: 0, kind: input, shape index: {}]
  %s1 = inlined_call_operand.vmem [shape: bf16[48,128], index: 1, kind: input, shape index: {}]
  %s2 = inlined_call_operand.hbm [shape: bf16[4,128,128], index: 2, kind: input, shape index: {}]
  %s3 = inlined_call_operand.vmem [shape: f32[8,128], index: 3, kind: input, shape index: {}]
  %s4 = inlined_call_operand.vmem [shape: f32[16,8], index: 4, kind: output, shape index: {}]
  %s5 = sld [smem:[#allocation0]]
  $region30: #{neuralnet_forward.1} parent=0
    _
  %s7 = ssub.s32 1, %s5
  %s8 = scalar_select 0, %s7, %s5
  $region1: #{neuralnet_forward.1} parent=0
    #allocation2 [shape = 'u8[131072]{0}', space=vmem, size = 0x20000, scoped, tag = 'input window, operand 2, single buffered']
    #allocation3 [shape = 's32[1]{0}', space=sflag, size = 0x4, scoped, tag = 'scoped memory for neuralnet_forward.1']
    %9 = vsyncpa [#allocation3], 0
    // Predicated region
    $region2: #{neuralnet_forward.1} parent=1 // pred_check
      _
    $region3: #{neuralnet_forward.1} parent=1 // pred_check_branch
      %11 = sbr.rel (0) target = $region5
    $region4: #{neuralnet_forward.1} parent=1 // pred_region
      _
    $region5: #{neuralnet_forward.1} parent=1 // pred_fallthru
      _
    // Predicated region
    $region6: #{neuralnet_forward.1} parent=1 // pred_check
      _
    $region7: #{neuralnet_forward.1} parent=1 // pred_check_branch
      %13 = sbr.rel (0) target = $region9
    $region8: #{neuralnet_forward.1} parent=1 // pred_region
      _
    $region9: #{neuralnet_forward.1} parent=1 // pred_fallthru
      _
    // Predicated region
    $region10: #{neuralnet_forward.1} parent=1 // pred_check
      _
    $region11: #{neuralnet_forward.1} parent=1 // pred_check_branch
      %15 = sbr.rel (0) target = $region13
    $region12: #{neuralnet_forward.1} parent=1 // pred_region
      %17 = vsyncadd [#allocation3], 0
      %s18 = sshll.u32 %s2, 4
      %s19 = int_to_ptr.hbm [resolvable:$true] %s18
      %s20 = sshll.u32 [#allocation2], 4
      %s21 = int_to_ptr.vmem [resolvable:$true] %s20
      %26 = dma.hbm_to_vmem [thread:$0]  %s19, 4096, %s21, [#allocation3], 64, 64, 4
    $region13: #{neuralnet_forward.1} parent=1 // pred_fallthru
      _
    // Predicated region
    $region14: #{neuralnet_forward.1} parent=1 // pred_check
      _
    $region15: #{neuralnet_forward.1} parent=1 // pred_check_branch
      %28 = sbr.rel (0) target = $region17
    $region16: #{neuralnet_forward.1} parent=1 // pred_region
      _
    $region17: #{neuralnet_forward.1} parent=1 // pred_fallthru
      _
    // Predicated region
    $region18: #{neuralnet_forward.1} parent=1 // pred_check
      _
    $region19: #{neuralnet_forward.1} parent=1 // pred_check_branch
      %30 = sbr.rel (0) target = $region21
    $region20: #{neuralnet_forward.1} parent=1 // pred_region
      %32 = dma.done [#allocation3], 4096
    $region21: #{neuralnet_forward.1} parent=1 // pred_fallthru
      _
    %v34 = vld [vmem:[%s3] sm:$0xff]
    %v35 = vld [vmem:[%s0] sm:$0xf]
    %v36 = vld [vmem:[%s0 + $0x4] sm:$0xf]
    %v37 = vld [vmem:[%s1] sm:$0xf]
    %v38 = vld [vmem:[%s1 + $0x4] sm:$0xf]
    %v39 = vld [vmem:[%s1 + $0x8] sm:$0xf]
    %v40 = vld [vmem:[%s1 + $0xc] sm:$0xf]
    %v41 = vld [vmem:[%s1 + $0x10] sm:$0xf]
    %v42 = vld [vmem:[%s1 + $0x14] sm:$0xf]
    %v43 = vperm.slane %v34, 0
    %v46 = vunpack.c.l.b16 %v35
    %v47 = vunpack.c.l.b16 %v36
    %v48 = vpack.c.b16 %v47, %v46
    %v55 = vunpack.c.l.b16 %v37
    %v56 = vunpack.c.l.b16 %v38
    %v57 = vunpack.c.l.b16 %v39
    %v58 = vunpack.c.l.b16 %v40
    %v59 = vunpack.c.l.b16 %v41
    %v60 = vunpack.c.l.b16 %v42
    %v61 = vpack.c.b16 %v56, %v55
    %v62 = vpack.c.b16 %v58, %v57
    %v63 = vpack.c.b16 %v60, %v59
    %vm67 = vcmask 392192
    %v69 = vsel %vm67, %v48, 0
    %71 = vmatpush.bf16.msra.mxu0 0
    %72 = vmatpush.bf16.msra.mxu0 0
    %73 = vmatpush.bf16.msra.mxu0 0
    %74 = vmatpush.bf16.msra.mxu0 0
    %75 = vmatpush.bf16.msra.mxu0 0
    %76 = vmatpush.bf16.msra.mxu0 %v63
    %77 = vmatpush.bf16.msra.mxu0 %v62
    %78 = vmatpush.bf16.msra.mxu0 %v61
    %79 = vmatmul.bf16.gmra.mxu0 %v69
    %v80 = vpop.f32.mrf.mxu0
    %v81 = vadd.f32 %v43, %v80
    %v82 = vpop.f32.mrf.mxu0
    %v83 = vadd.f32 %v43, %v82
    %84 = vdwg.mxu0
    %v85 = vmax.f32 %v81, 0.0
    %v86 = vmax.f32 %v83, 0.0
    %v87 = vpack.c.bf16 %v86, %v85
    %v88 = vld [vmem:[#allocation2] sm:$0xf]
    %v89 = vld [vmem:[#allocation2 + $0x4] sm:$0xf]
    %v90 = vld [vmem:[#allocation2 + $0x8] sm:$0xf]
    %v91 = vld [vmem:[#allocation2 + $0xc] sm:$0xf]
    %v92 = vld [vmem:[#allocation2 + $0x10] sm:$0xf]
    %v93 = vld [vmem:[#allocation2 + $0x14] sm:$0xf]
    %v94 = vld [vmem:[#allocation2 + $0x18] sm:$0xf]
    %v95 = vld [vmem:[#allocation2 + $0x1c] sm:$0xf]
    %v96 = vld [vmem:[#allocation2 + $0x20] sm:$0xf]
    %v97 = vld [vmem:[#allocation2 + $0x24] sm:$0xf]
    %v98 = vld [vmem:[#allocation2 + $0x28] sm:$0xf]
    %v99 = vld [vmem:[#allocation2 + $0x2c] sm:$0xf]
    %v100 = vld [vmem:[#allocation2 + $0x30] sm:$0xf]
    %v101 = vld [vmem:[#allocation2 + $0x34] sm:$0xf]
    %v102 = vld [vmem:[#allocation2 + $0x38] sm:$0xf]
    %v103 = vld [vmem:[#allocation2 + $0x3c] sm:$0xf]
    %v104 = vperm.slane %v34, 1
    %v121 = vunpack.c.l.b16 %v88
    %v122 = vunpack.c.l.b16 %v89
    %v123 = vunpack.c.l.b16 %v90
    %v124 = vunpack.c.l.b16 %v91
    %v125 = vunpack.c.l.b16 %v92
    %v126 = vunpack.c.l.b16 %v93
    %v127 = vunpack.c.l.b16 %v94
    %v128 = vunpack.c.l.b16 %v95
    %v129 = vunpack.c.l.b16 %v96
    %v130 = vunpack.c.l.b16 %v97
    %v131 = vunpack.c.l.b16 %v98
    %v132 = vunpack.c.l.b16 %v99
    %v133 = vunpack.c.l.b16 %v100
    %v134 = vunpack.c.l.b16 %v101
    %v135 = vunpack.c.l.b16 %v102
    %v136 = vunpack.c.l.b16 %v103
    %v137 = vpack.c.b16 %v122, %v121
    %v138 = vpack.c.b16 %v124, %v123
    %v139 = vpack.c.b16 %v126, %v125
    %v140 = vpack.c.b16 %v128, %v127
    %v141 = vpack.c.b16 %v130, %v129
    %v142 = vpack.c.b16 %v132, %v131
    %v143 = vpack.c.b16 %v134, %v133
    %v144 = vpack.c.b16 %v136, %v135
    %153 = vmatpush.bf16.msra.mxu0 %v144
    %154 = vmatpush.bf16.msra.mxu0 %v143
    %155 = vmatpush.bf16.msra.mxu0 %v142
    %156 = vmatpush.bf16.msra.mxu0 %v141
    %157 = vmatpush.bf16.msra.mxu0 %v140
    %158 = vmatpush.bf16.msra.mxu0 %v139
    %159 = vmatpush.bf16.msra.mxu0 %v138
    %160 = vmatpush.bf16.msra.mxu0 %v137
    %161 = vmatmul.bf16.gmra.mxu0 %v87
    %v162 = vpop.f32.mrf.mxu0
    %v163 = vadd.f32 %v104, %v162
    %v164 = vpop.f32.mrf.mxu0
    %v165 = vadd.f32 %v104, %v164
    %166 = vdwg.mxu0
    %v167 = vmax.f32 %v163, 0.0
    %v168 = vmax.f32 %v165, 0.0
    %v169 = vpack.c.bf16 %v168, %v167
    %s170 = scalar_lea.vmem [#allocation2], 64
    %v171 = vld [vmem:[%s170] sm:$0xf]
    %v172 = vld [vmem:[%s170 + $0x4] sm:$0xf]
    %v173 = vld [vmem:[%s170 + $0x8] sm:$0xf]
    %v174 = vld [vmem:[%s170 + $0xc] sm:$0xf]
    %v175 = vld [vmem:[%s170 + $0x10] sm:$0xf]
    %v176 = vld [vmem:[%s170 + $0x14] sm:$0xf]
    %v177 = vld [vmem:[%s170 + $0x18] sm:$0xf]
    %v178 = vld [vmem:[%s170 + $0x1c] sm:$0xf]
    %v179 = vld [vmem:[%s170 + $0x20] sm:$0xf]
    %v180 = vld [vmem:[%s170 + $0x24] sm:$0xf]
    %v181 = vld [vmem:[%s170 + $0x28] sm:$0xf]
    %v182 = vld [vmem:[%s170 + $0x2c] sm:$0xf]
    %v183 = vld [vmem:[%s170 + $0x30] sm:$0xf]
    %v184 = vld [vmem:[%s170 + $0x34] sm:$0xf]
    %v185 = vld [vmem:[%s170 + $0x38] sm:$0xf]
    %v186 = vld [vmem:[%s170 + $0x3c] sm:$0xf]
    %v187 = vperm.slane %v34, 2
    %v204 = vunpack.c.l.b16 %v171
    %v205 = vunpack.c.l.b16 %v172
    %v206 = vunpack.c.l.b16 %v173
    %v207 = vunpack.c.l.b16 %v174
    %v208 = vunpack.c.l.b16 %v175
    %v209 = vunpack.c.l.b16 %v176
    %v210 = vunpack.c.l.b16 %v177
    %v211 = vunpack.c.l.b16 %v178
    %v212 = vunpack.c.l.b16 %v179
    %v213 = vunpack.c.l.b16 %v180
    %v214 = vunpack.c.l.b16 %v181
    %v215 = vunpack.c.l.b16 %v182
    %v216 = vunpack.c.l.b16 %v183
    %v217 = vunpack.c.l.b16 %v184
    %v218 = vunpack.c.l.b16 %v185
    %v219 = vunpack.c.l.b16 %v186
    %v220 = vpack.c.b16 %v205, %v204
    %v221 = vpack.c.b16 %v207, %v206
    %v222 = vpack.c.b16 %v209, %v208
    %v223 = vpack.c.b16 %v211, %v210
    %v224 = vpack.c.b16 %v213, %v212
    %v225 = vpack.c.b16 %v215, %v214
    %v226 = vpack.c.b16 %v217, %v216
    %v227 = vpack.c.b16 %v219, %v218
    %236 = vmatpush.bf16.msra.mxu0 %v227
    %237 = vmatpush.bf16.msra.mxu0 %v226
    %238 = vmatpush.bf16.msra.mxu0 %v225
    %239 = vmatpush.bf16.msra.mxu0 %v224
    %240 = vmatpush.bf16.msra.mxu0 %v223
    %241 = vmatpush.bf16.msra.mxu0 %v222
    %242 = vmatpush.bf16.msra.mxu0 %v221
    %243 = vmatpush.bf16.msra.mxu0 %v220
    %244 = vmatmul.bf16.gmra.mxu0 %v169
    %v245 = vpop.f32.mrf.mxu0
    %v246 = vadd.f32 %v187, %v245
    %v247 = vpop.f32.mrf.mxu0
    %v248 = vadd.f32 %v187, %v247
    %249 = vdwg.mxu0
    %v250 = vmax.f32 %v246, 0.0
    %v251 = vmax.f32 %v248, 0.0
    %v252 = vpack.c.bf16 %v251, %v250
    %s253 = scalar_lea.vmem [#allocation2], 128
    %v254 = vld [vmem:[%s253] sm:$0xf]
    %v255 = vld [vmem:[%s253 + $0x4] sm:$0xf]
    %v256 = vld [vmem:[%s253 + $0x8] sm:$0xf]
    %v257 = vld [vmem:[%s253 + $0xc] sm:$0xf]
    %v258 = vld [vmem:[%s253 + $0x10] sm:$0xf]
    %v259 = vld [vmem:[%s253 + $0x14] sm:$0xf]
    %v260 = vld [vmem:[%s253 + $0x18] sm:$0xf]
    %v261 = vld [vmem:[%s253 + $0x1c] sm:$0xf]
    %v262 = vld [vmem:[%s253 + $0x20] sm:$0xf]
    %v263 = vld [vmem:[%s253 + $0x24] sm:$0xf]
    %v264 = vld [vmem:[%s253 + $0x28] sm:$0xf]
    %v265 = vld [vmem:[%s253 + $0x2c] sm:$0xf]
    %v266 = vld [vmem:[%s253 + $0x30] sm:$0xf]
    %v267 = vld [vmem:[%s253 + $0x34] sm:$0xf]
    %v268 = vld [vmem:[%s253 + $0x38] sm:$0xf]
    %v269 = vld [vmem:[%s253 + $0x3c] sm:$0xf]
    %v270 = vperm.slane %v34, 3
    %v287 = vunpack.c.l.b16 %v254
    %v288 = vunpack.c.l.b16 %v255
    %v289 = vunpack.c.l.b16 %v256
    %v290 = vunpack.c.l.b16 %v257
    %v291 = vunpack.c.l.b16 %v258
    %v292 = vunpack.c.l.b16 %v259
    %v293 = vunpack.c.l.b16 %v260
    %v294 = vunpack.c.l.b16 %v261
    %v295 = vunpack.c.l.b16 %v262
    %v296 = vunpack.c.l.b16 %v263
    %v297 = vunpack.c.l.b16 %v264
    %v298 = vunpack.c.l.b16 %v265
    %v299 = vunpack.c.l.b16 %v266
    %v300 = vunpack.c.l.b16 %v267
    %v301 = vunpack.c.l.b16 %v268
    %v302 = vunpack.c.l.b16 %v269
    %v303 = vpack.c.b16 %v288, %v287
    %v304 = vpack.c.b16 %v290, %v289
    %v305 = vpack.c.b16 %v292, %v291
    %v306 = vpack.c.b16 %v294, %v293
    %v307 = vpack.c.b16 %v296, %v295
    %v308 = vpack.c.b16 %v298, %v297
    %v309 = vpack.c.b16 %v300, %v299
    %v310 = vpack.c.b16 %v302, %v301
    %319 = vmatpush.bf16.msra.mxu0 %v310
    %320 = vmatpush.bf16.msra.mxu0 %v309
    %321 = vmatpush.bf16.msra.mxu0 %v308
    %322 = vmatpush.bf16.msra.mxu0 %v307
    %323 = vmatpush.bf16.msra.mxu0 %v306
    %324 = vmatpush.bf16.msra.mxu0 %v305
    %325 = vmatpush.bf16.msra.mxu0 %v304
    %326 = vmatpush.bf16.msra.mxu0 %v303
    %327 = vmatmul.bf16.gmra.mxu0 %v252
    %v328 = vpop.f32.mrf.mxu0
    %v329 = vadd.f32 %v270, %v328
    %v330 = vpop.f32.mrf.mxu0
    %v331 = vadd.f32 %v270, %v330
    %332 = vdwg.mxu0
    %v333 = vmax.f32 %v329, 0.0
    %v334 = vmax.f32 %v331, 0.0
    %v335 = vpack.c.bf16 %v334, %v333
    %s336 = scalar_lea.vmem [#allocation2], 192
    %v337 = vld [vmem:[%s336] sm:$0xf]
    %v338 = vld [vmem:[%s336 + $0x4] sm:$0xf]
    %v339 = vld [vmem:[%s336 + $0x8] sm:$0xf]
    %v340 = vld [vmem:[%s336 + $0xc] sm:$0xf]
    %v341 = vld [vmem:[%s336 + $0x10] sm:$0xf]
    %v342 = vld [vmem:[%s336 + $0x14] sm:$0xf]
    %v343 = vld [vmem:[%s336 + $0x18] sm:$0xf]
    %v344 = vld [vmem:[%s336 + $0x1c] sm:$0xf]
    %v345 = vld [vmem:[%s336 + $0x20] sm:$0xf]
    %v346 = vld [vmem:[%s336 + $0x24] sm:$0xf]
    %v347 = vld [vmem:[%s336 + $0x28] sm:$0xf]
    %v348 = vld [vmem:[%s336 + $0x2c] sm:$0xf]
    %v349 = vld [vmem:[%s336 + $0x30] sm:$0xf]
    %v350 = vld [vmem:[%s336 + $0x34] sm:$0xf]
    %v351 = vld [vmem:[%s336 + $0x38] sm:$0xf]
    %v352 = vld [vmem:[%s336 + $0x3c] sm:$0xf]
    %v353 = vperm.slane %v34, 4
    %v370 = vunpack.c.l.b16 %v337
    %v371 = vunpack.c.l.b16 %v338
    %v372 = vunpack.c.l.b16 %v339
    %v373 = vunpack.c.l.b16 %v340
    %v374 = vunpack.c.l.b16 %v341
    %v375 = vunpack.c.l.b16 %v342
    %v376 = vunpack.c.l.b16 %v343
    %v377 = vunpack.c.l.b16 %v344
    %v378 = vunpack.c.l.b16 %v345
    %v379 = vunpack.c.l.b16 %v346
    %v380 = vunpack.c.l.b16 %v347
    %v381 = vunpack.c.l.b16 %v348
    %v382 = vunpack.c.l.b16 %v349
    %v383 = vunpack.c.l.b16 %v350
    %v384 = vunpack.c.l.b16 %v351
    %v385 = vunpack.c.l.b16 %v352
    %v386 = vpack.c.b16 %v371, %v370
    %v387 = vpack.c.b16 %v373, %v372
    %v388 = vpack.c.b16 %v375, %v374
    %v389 = vpack.c.b16 %v377, %v376
    %v390 = vpack.c.b16 %v379, %v378
    %v391 = vpack.c.b16 %v381, %v380
    %v392 = vpack.c.b16 %v383, %v382
    %v393 = vpack.c.b16 %v385, %v384
    %402 = vmatpush.bf16.msra.mxu0 %v393
    %403 = vmatpush.bf16.msra.mxu0 %v392
    %404 = vmatpush.bf16.msra.mxu0 %v391
    %405 = vmatpush.bf16.msra.mxu0 %v390
    %406 = vmatpush.bf16.msra.mxu0 %v389
    %407 = vmatpush.bf16.msra.mxu0 %v388
    %408 = vmatpush.bf16.msra.mxu0 %v387
    %409 = vmatpush.bf16.msra.mxu0 %v386
    %410 = vmatmul.bf16.gmra.mxu0 %v335
    %v411 = vpop.f32.mrf.mxu0
    %v412 = vadd.f32 %v353, %v411
    %v413 = vpop.f32.mrf.mxu0
    %v414 = vadd.f32 %v353, %v413
    %415 = vdwg.mxu0
    %vm416 = vcmask 64512
    %417 = vst.msk [vmem:[%s4] sm:$0xff] %vm416, %v412
    %418 = vst.msk [vmem:[%s4 + $0x8] sm:$0xff] %vm416, %v414
    // Predicated region
    $region22: #{neuralnet_forward.1} parent=1 // pred_check
      _
    $region23: #{neuralnet_forward.1} parent=1 // pred_check_branch
      %420 = sbr.rel (0) target = $region25
    $region24: #{neuralnet_forward.1} parent=1 // pred_region
      _
    $region25: #{neuralnet_forward.1} parent=1 // pred_fallthru
      _
    // Predicated region
    $region26: #{neuralnet_forward.1} parent=1 // pred_check
      _
    $region27: #{neuralnet_forward.1} parent=1 // pred_check_branch
      %422 = sbr.rel (0) target = $region29
    $region28: #{neuralnet_forward.1} parent=1 // pred_region
      _
    $region29: #{neuralnet_forward.1} parent=1 // pred_fallthru
      _
    %423 = vsyncpa [#allocation3], 1

</llo_original>
